<compile_context>
chip_gen: v7x
topology: tpu7x:2x2x1
jax: 0.10.0
libtpu: 0.0.40
codegen_flags: <defaults>
</compile_context>

<pallas_src>
import functools

import jax
import jax.numpy as jnp
from jax import lax
from jax.experimental import pallas as pl
from jax.experimental.pallas import tpu as pltpu


def _attention_kernel(x_ref, w_qkv_ref, w_out_ref, b_out_ref, o_ref, *,
                      heads, dim_head, mxu_dtype, approx_recip):
    """One grid step = one batch row (full MHSA forward for that row).

    x_ref     : (1, N, D)        VMEM, already in mxu_dtype (host cast)
    w_qkv_ref : (D, 3*inner)     VMEM, resident, scale pre-folded into Q cols
    w_out_ref : (inner, D)       VMEM, resident
    b_out_ref : (1, D) f32       VMEM, resident
    o_ref     : (1, N, D)        VMEM
    """
    inner = heads * dim_head
    x = x_ref[0]                                                    # (N, D)

    # Fused QKV projection: single wide, lane-dense matmul. f32 accumulation,
    # then a single cast of the whole (N, 3*inner) result to the MXU dtype.
    qkv = jnp.dot(x, w_qkv_ref[...],
                  preferred_element_type=jnp.float32)               # (N, 3*inner)
    qkv = qkv.astype(mxu_dtype)

    # Per-head scaled dot-product attention (statically unrolled; heads small).
    head_outs = []
    for h in range(heads):
        q = qkv[:, h * dim_head:(h + 1) * dim_head]                 # (N, dh), scale folded in
        k = qkv[:, inner + h * dim_head: inner + (h + 1) * dim_head]
        v = qkv[:, 2 * inner + h * dim_head: 2 * inner + (h + 1) * dim_head]

        # NT contraction on the MXU (no explicit k transpose).
        dots = lax.dot_general(q, k, (((1,), (1,)), ((), ())),
                               preferred_element_type=jnp.float32)  # (N, N)

        # Numerically-stable softmax in f32.
        m = jnp.max(dots, axis=-1, keepdims=True)
        p = jnp.exp(dots - m)
        denom = jnp.sum(p, axis=-1, keepdims=True)
        attn = (p * pl.reciprocal(denom, approx=approx_recip)).astype(mxu_dtype)

        # attn @ v for this head; dropout(p=0) is identity.
        out_h = jnp.dot(attn, v, preferred_element_type=jnp.float32)  # (N, dh)
        head_outs.append(out_h.astype(mxu_dtype))

    # b h n d -> b n (h d), then one wide output projection + bias.
    out_all = head_outs[0] if heads == 1 else jnp.concatenate(head_outs, axis=-1)
    o = jnp.dot(out_all, w_out_ref[...],
                preferred_element_type=jnp.float32) + b_out_ref[...]  # (N, D)
    o_ref[0] = o.astype(o_ref.dtype)


def attention_forward(x, w_qkv, w_out, b_out, *, heads, dim_head,
                      cast_to_bf16=True):
    """Forward pass of the PyTorch Attention module.

    cast_to_bf16=True (default, fast path): x and weights are cast to bf16 on
    the host, MXU matmuls run bf16-in / f32-accumulate, softmax denominator
    uses the EUP approx reciprocal. Set cast_to_bf16=False for f32 matmul
    semantics (correctness mode only -- do not benchmark it).
    """
    B, N, D = x.shape
    inner = heads * dim_head
    assert w_qkv.shape == (D, 3 * inner)
    assert w_out.shape == (inner, D)
    scale = dim_head ** (-0.5)

    # Host-side prep (done once):
    #  * fold softmax scale into the Q columns of the fused QKV weight (in f32,
    #    before any bf16 cast; for power-of-two dim_head the scale is exact),
    #  * cast weights / x to bf16 on the fast path,
    #  * keep bias in f32 (added after the f32-accumulated output projection).
    w_qkv_scaled = w_qkv.astype(jnp.float32).at[:, :inner].multiply(scale)

    wdtype = jnp.bfloat16 if cast_to_bf16 else w_qkv.dtype
    w_qkv_d = w_qkv_scaled.astype(wdtype)
    w_out_d = w_out.astype(wdtype)
    b_out2 = b_out.reshape(1, D).astype(jnp.float32)
    x_d = x.astype(jnp.bfloat16) if cast_to_bf16 else x

    mxu_dtype = jnp.bfloat16 if cast_to_bf16 else x.dtype
    kernel = functools.partial(
        _attention_kernel, heads=heads, dim_head=dim_head,
        mxu_dtype=mxu_dtype, approx_recip=cast_to_bf16)

    return pl.pallas_call(
        kernel,
        out_shape=jax.ShapeDtypeStruct((B, N, D), x.dtype),
        grid_spec=pltpu.PrefetchScalarGridSpec(
            num_scalar_prefetch=0,
            grid=(B,),
            in_specs=[
                # x: one batch row per grid step.
                pl.BlockSpec((1, N, D), lambda b: (b, 0, 0)),
                # Weights: constant index_map -> DMA'd once, VMEM-resident
                # across the whole grid.
                pl.BlockSpec((D, 3 * inner), lambda b: (0, 0)),
                pl.BlockSpec((inner, D), lambda b: (0, 0)),
                pl.BlockSpec((1, D), lambda b: (0, 0)),
            ],
            out_specs=pl.BlockSpec((1, N, D), lambda b: (b, 0, 0)),
        ),
        compiler_params=pltpu.CompilerParams(
            dimension_semantics=("parallel",)),
    )(x_d, w_qkv_d, w_out_d, b_out2)


def attention_reference(x, w_qkv, w_out, b_out, *, heads, dim_head):
    """Pure-JAX reference matching the PyTorch forward."""
    B, N, D = x.shape
    inner = heads * dim_head
    scale = dim_head ** (-0.5)
    qkv = x @ w_qkv                                    # (B, N, 3*inner)
    q, k, v = jnp.split(qkv, 3, axis=-1)

    def to_heads(t):                                   # b n (h d) -> b h n d
        return t.reshape(B, N, heads, dim_head).transpose(0, 2, 1, 3)

    q, k, v = map(to_heads, (q, k, v))
    dots = jnp.einsum('bhnd,bhmd->bhnm', q, k) * scale
    attn = jax.nn.softmax(dots, axis=-1)
    out = jnp.einsum('bhnm,bhmd->bhnd', attn, v)
    out = out.transpose(0, 2, 1, 3).reshape(B, N, inner)  # b h n d -> b n (h d)
    return out @ w_out + b_out


if __name__ == "__main__":
    # Small shapes consistent with the module (project_out branch active).
    B, N, D = 2, 8, 32
    heads, dim_head = 2, 16
    inner = heads * dim_head

    key = jax.random.PRNGKey(0)
    kx, kqkv, kout, kb = jax.random.split(key, 4)

    x = jax.random.normal(kx, (B, N, D), dtype=jnp.float32)
    w_qkv = jax.random.normal(kqkv, (D, 3 * inner), dtype=jnp.float32) * 0.05
    w_out = jax.random.normal(kout, (inner, D), dtype=jnp.float32) * 0.05
    b_out = jax.random.normal(kb, (D,), dtype=jnp.float32) * 0.05

    y_ref = attention_reference(x, w_qkv, w_out, b_out,
                                heads=heads, dim_head=dim_head)

    # Exact path (f32 MXU inputs) -- strict semantics check vs reference.
    y_exact = attention_forward(x, w_qkv, w_out, b_out,
                                heads=heads, dim_head=dim_head,
                                cast_to_bf16=False)
    y_exact = jax.block_until_ready(y_exact)
    assert y_exact.shape == (B, N, D)
    assert jnp.allclose(y_exact, y_ref, atol=1e-4, rtol=1e-4), \
        "exact-path mismatch vs reference"

    # Default fast path (bf16 MXU inputs, f32 accumulation).
    y_fast = attention_forward(x, w_qkv, w_out, b_out,
                               heads=heads, dim_head=dim_head)
    y_fast = jax.block_until_ready(y_fast)
    assert y_fast.shape == (B, N, D)
    assert jnp.allclose(y_fast, y_ref, atol=3e-2, rtol=3e-2), \
        "bf16-path mismatch vs reference"

    print("KERNEL_OK")
</pallas_src>

<mosaic_0001>
module attributes {stable_mosaic.version = 11 : i64} {
  func.func @_attention_kernel(%arg0: i32, %arg1: memref<1x8x32xf32, #tpu.memory_space<vmem>>, %arg2: memref<32x96xf32, #tpu.memory_space<vmem>>, %arg3: memref<32x32xf32, #tpu.memory_space<vmem>>, %arg4: memref<1x32xf32, #tpu.memory_space<vmem>>, %arg5: memref<1x8x32xf32, #tpu.memory_space<vmem>>) attributes {dimension_semantics = [#tpu.dimension_semantics<parallel>], iteration_bounds = array<i64: 2>, scalar_prefetch = 0 : i64, scratch_operands = 0 : i64, tpu.core_type = #tpu.core_type<tc>, window_params = [{transform_indices = @transform_0, window_bounds = array<i64: 1, 8, 32>}, {pipeline_mode = #tpu.pipeline_mode<synchronous>, transform_indices = @transform_1, window_bounds = array<i64: 32, 96>}, {pipeline_mode = #tpu.pipeline_mode<synchronous>, transform_indices = @transform_2, window_bounds = array<i64: 32, 32>}, {pipeline_mode = #tpu.pipeline_mode<synchronous>, transform_indices = @transform_3, window_bounds = array<i64: 1, 32>}, {transform_indices = @transform_4, window_bounds = array<i64: 1, 8, 32>}]} {
    %c0 = arith.constant 0 : index
    %c0_0 = arith.constant 0 : index
    %c0_1 = arith.constant 0 : index
    %0 = vector.load %arg1[%c0, %c0_0, %c0_1] : memref<1x8x32xf32, #tpu.memory_space<vmem>>, vector<1x8x32xf32>
    %1 = vector.shape_cast %0 : vector<1x8x32xf32> to vector<8x32xf32>
    %c0_2 = arith.constant 0 : index
    %c0_3 = arith.constant 0 : index
    %2 = vector.load %arg2[%c0_2, %c0_3] : memref<32x96xf32, #tpu.memory_space<vmem>>, vector<32x96xf32>
    %cst = arith.constant dense<0.000000e+00> : vector<8x96xf32>
    %3 = tpu.matmul %1, %2, %cst {dimension_numbers = #tpu.dot_dimension_numbers<[1], [0], [0], [1], [0, 0, 1, 1], [], []>} : vector<8x32xf32>, vector<32x96xf32>, vector<8x96xf32> -> vector<8x96xf32>
    %4 = vector.extract_strided_slice %3 {offsets = [0, 0], sizes = [8, 16], strides = [1, 1]} : vector<8x96xf32> to vector<8x16xf32>
    %5 = vector.extract_strided_slice %3 {offsets = [0, 32], sizes = [8, 16], strides = [1, 1]} : vector<8x96xf32> to vector<8x16xf32>
    %6 = vector.extract_strided_slice %3 {offsets = [0, 64], sizes = [8, 16], strides = [1, 1]} : vector<8x96xf32> to vector<8x16xf32>
    %cst_4 = arith.constant dense<0.000000e+00> : vector<8x8xf32>
    %7 = tpu.matmul %4, %5, %cst_4 {dimension_numbers = #tpu.dot_dimension_numbers<[1], [1], [0], [0], [0, 0, 1, 0], [], []>} : vector<8x16xf32>, vector<8x16xf32>, vector<8x8xf32> -> vector<8x8xf32>
    %cst_5 = arith.constant dense<0xFF800000> : vector<8xf32>
    %8 = vector.multi_reduction <maximumf>, %7, %cst_5 [1] : vector<8x8xf32> to vector<8xf32>
    %9 = vector.shape_cast %8 : vector<8xf32> to vector<8x1xf32>
    %10 = vector.broadcast %9 : vector<8x1xf32> to vector<8x8xf32>
    %11 = arith.subf %7, %10 : vector<8x8xf32>
    %12 = math.exp %11 : vector<8x8xf32>
    %cst_6 = arith.constant dense<0.000000e+00> : vector<8xf32>
    %13 = vector.multi_reduction <add>, %12, %cst_6 [1] : vector<8x8xf32> to vector<8xf32>
    %14 = vector.shape_cast %13 : vector<8xf32> to vector<8x1xf32>
    %15 = tpu.reciprocal %14 : vector<8x1xf32> -> vector<8x1xf32>
    %16 = vector.broadcast %15 : vector<8x1xf32> to vector<8x8xf32>
    %17 = arith.mulf %12, %16 : vector<8x8xf32>
    %cst_7 = arith.constant dense<0.000000e+00> : vector<8x16xf32>
    %18 = tpu.matmul %17, %6, %cst_7 {dimension_numbers = #tpu.dot_dimension_numbers<[1], [0], [0], [1], [0, 0, 1, 1], [], []>} : vector<8x8xf32>, vector<8x16xf32>, vector<8x16xf32> -> vector<8x16xf32>
    %19 = vector.extract_strided_slice %3 {offsets = [0, 16], sizes = [8, 16], strides = [1, 1]} : vector<8x96xf32> to vector<8x16xf32>
    %20 = vector.extract_strided_slice %3 {offsets = [0, 48], sizes = [8, 16], strides = [1, 1]} : vector<8x96xf32> to vector<8x16xf32>
    %21 = vector.extract_strided_slice %3 {offsets = [0, 80], sizes = [8, 16], strides = [1, 1]} : vector<8x96xf32> to vector<8x16xf32>
    %cst_8 = arith.constant dense<0.000000e+00> : vector<8x8xf32>
    %22 = tpu.matmul %19, %20, %cst_8 {dimension_numbers = #tpu.dot_dimension_numbers<[1], [1], [0], [0], [0, 0, 1, 0], [], []>} : vector<8x16xf32>, vector<8x16xf32>, vector<8x8xf32> -> vector<8x8xf32>
    %cst_9 = arith.constant dense<0xFF800000> : vector<8xf32>
    %23 = vector.multi_reduction <maximumf>, %22, %cst_9 [1] : vector<8x8xf32> to vector<8xf32>
    %24 = vector.shape_cast %23 : vector<8xf32> to vector<8x1xf32>
    %25 = vector.broadcast %24 : vector<8x1xf32> to vector<8x8xf32>
    %26 = arith.subf %22, %25 : vector<8x8xf32>
    %27 = math.exp %26 : vector<8x8xf32>
    %cst_10 = arith.constant dense<0.000000e+00> : vector<8xf32>
    %28 = vector.multi_reduction <add>, %27, %cst_10 [1] : vector<8x8xf32> to vector<8xf32>
    %29 = vector.shape_cast %28 : vector<8xf32> to vector<8x1xf32>
    %30 = tpu.reciprocal %29 : vector<8x1xf32> -> vector<8x1xf32>
    %31 = vector.broadcast %30 : vector<8x1xf32> to vector<8x8xf32>
    %32 = arith.mulf %27, %31 : vector<8x8xf32>
    %cst_11 = arith.constant dense<0.000000e+00> : vector<8x16xf32>
    %33 = tpu.matmul %32, %21, %cst_11 {dimension_numbers = #tpu.dot_dimension_numbers<[1], [0], [0], [1], [0, 0, 1, 1], [], []>} : vector<8x8xf32>, vector<8x16xf32>, vector<8x16xf32> -> vector<8x16xf32>
    %34 = tpu.concatenate %18, %33 in 1 : vector<8x16xf32>, vector<8x16xf32> -> vector<8x32xf32>
    %c0_12 = arith.constant 0 : index
    %c0_13 = arith.constant 0 : index
    %35 = vector.load %arg3[%c0_12, %c0_13] : memref<32x32xf32, #tpu.memory_space<vmem>>, vector<32x32xf32>
    %cst_14 = arith.constant dense<0.000000e+00> : vector<8x32xf32>
    %36 = tpu.matmul %34, %35, %cst_14 {dimension_numbers = #tpu.dot_dimension_numbers<[1], [0], [0], [1], [0, 0, 1, 1], [], []>} : vector<8x32xf32>, vector<32x32xf32>, vector<8x32xf32> -> vector<8x32xf32>
    %c0_15 = arith.constant 0 : index
    %c0_16 = arith.constant 0 : index
    %37 = vector.load %arg4[%c0_15, %c0_16] : memref<1x32xf32, #tpu.memory_space<vmem>>, vector<1x32xf32>
    %38 = vector.broadcast %37 : vector<1x32xf32> to vector<8x32xf32>
    %39 = arith.addf %36, %38 : vector<8x32xf32>
    %c0_17 = arith.constant 0 : index
    %c0_18 = arith.constant 0 : index
    %c0_19 = arith.constant 0 : index
    %40 = vector.load %arg5[%c0_17, %c0_18, %c0_19] : memref<1x8x32xf32, #tpu.memory_space<vmem>>, vector<1x8x32xf32>
    %41 = vector.shape_cast %40 : vector<1x8x32xf32> to vector<8x32xf32>
    %42 = vector.shape_cast %39 : vector<8x32xf32> to vector<1x8x32xf32>
    tpu.vector_store %arg5[%c0_17, %c0_18, %c0_19], %42 {strides = array<i32>} : memref<1x8x32xf32, #tpu.memory_space<vmem>>, vector<1x8x32xf32>,
    return
  }
  func.func @transform_0(%arg0: i32) -> (i32, i32, i32) {
    %c0_i32 = arith.constant 0 : i32
    %c0_i32_0 = arith.constant 0 : i32
    %c0_i32_1 = arith.constant 0 : i32
    return %arg0, %c0_i32, %c0_i32_0 : i32, i32, i32
  }
  func.func @transform_1(%arg0: i32) -> (i32, i32) {
    %c0_i32 = arith.constant 0 : i32
    %c0_i32_0 = arith.constant 0 : i32
    %c0_i32_1 = arith.constant 0 : i32
    return %c0_i32, %c0_i32_0 : i32, i32
  }
  func.func @transform_2(%arg0: i32) -> (i32, i32) {
    %c0_i32 = arith.constant 0 : i32
    %c0_i32_0 = arith.constant 0 : i32
    %c0_i32_1 = arith.constant 0 : i32
    return %c0_i32, %c0_i32_0 : i32, i32
  }
  func.func @transform_3(%arg0: i32) -> (i32, i32) {
    %c0_i32 = arith.constant 0 : i32
    %c0_i32_0 = arith.constant 0 : i32
    %c0_i32_1 = arith.constant 0 : i32
    return %c0_i32, %c0_i32_0 : i32, i32
  }
  func.func @transform_4(%arg0: i32) -> (i32, i32, i32) {
    %c0_i32 = arith.constant 0 : i32
    %c0_i32_0 = arith.constant 0 : i32
    %c0_i32_1 = arith.constant 0 : i32
    return %arg0, %c0_i32, %c0_i32_0 : i32, i32, i32
  }
}

</mosaic_0001>

<llo_original>
// kernel: tpu_custom_call.1
$region0: #{tpu_custom_call.1}
  #allocation0 [shape = 'u32[]', space=smem, size = 0x4, offset = 0x4, fixed_abs, tag = 'smem constant byte address 0x4 - core index']
  #allocation1 [shape = 'u32[144,128]{1,0:T(1,128)}', space=vmem, size = 0x12000, scoped, tag = 'internal scratch']
  %s0 = inlined_call_operand.hbm [shape: f32[2,8,32], index: 0, kind: input, shape index: {}]
  %s1 = inlined_call_operand.hbm [shape: f32[32,96], index: 1, kind: input, shape index: {}]
  %s2 = inlined_call_operand.hbm [shape: f32[32,32], index: 2, kind: input, shape index: {}]
  %s3 = inlined_call_operand.vmem [shape: f32[1,32], index: 3, kind: input, shape index: {}]
  %s4 = inlined_call_operand.hbm [shape: f32[2,8,32], index: 4, kind: output, shape index: {}]
  %s5 = sld [smem:[#allocation0]]
  $region61: #{tpu_custom_call.1} parent=0
    _
  %s7 = ssub.s32 1, %s5
  %s8 = scalar_select 0, %s7, %s5
  $region1: #{tpu_custom_call.1} parent=0
    #allocation2 [shape = 'u8[8192]{0}', space=vmem, size = 0x2000, scoped, tag = 'input window, operand 0']
    #allocation3 [shape = 's32[2]{0}', space=sflag, size = 0x8, scoped, tag = 'scoped memory for tpu_custom_call.1']
    #allocation4 [shape = 's32[2]{0}', space=sflag, size = 0x8, scoped, tag = 'scoped memory for tpu_custom_call.1']
    #allocation5 [shape = 'u8[16384]{0}', space=vmem, size = 0x4000, scoped, tag = 'input window, operand 1, single buffered']
    #allocation6 [shape = 's32[1]{0}', space=sflag, size = 0x4, scoped, tag = 'scoped memory for tpu_custom_call.1']
    #allocation7 [shape = 'u8[16384]{0}', space=vmem, size = 0x4000, scoped, tag = 'input window, operand 2, single buffered']
    #allocation8 [shape = 'u8[8192]{0}', space=vmem, size = 0x2000, scoped, tag = 'output window, operand 0']
    %9 = vsyncpa [#allocation3], 0
    %s10 = scalar_lea.sflag [#allocation3], 1
    %11 = vsyncpa %s10, 0
    %12 = vsyncpa [#allocation6], 0
    %13 = vsyncpa [#allocation4], 0
    %s14 = scalar_lea.sflag [#allocation4], 1
    %15 = vsyncpa %s14, 0
    loop: start=0, step=1, limit=4
    $region2: #{tpu_custom_call.1} parent=1 // loop_pre_header
      _
    $region3: #{tpu_custom_call.1} parent=1 // loop_header
      %s17 = sphi 0, %s21
      %p18 = scmp.ge.s32.totalorder %s17, 4
      %s27 = sphi 0, %s29
      %s30 = sphi 0, %s27
      %s31 = sphi 0, %s30
      %s47 = sphi 0, %s31
      %s51 = sphi 0, %s51
      %s53 = sphi 0, %s51
      %s54 = sphi 0, %s53
      %s68 = sphi 0, %s54
      %s72 = sphi 0, %s72
      %s74 = sphi 0, %s72
      %s75 = sphi 0, %s74
      %s89 = sphi 0, %s75
      %s93 = sphi 0, %s93
      %s95 = sphi 0, %s93
      %s96 = sphi 0, %s95
      %s110 = sphi 0, %s96
      %s116 = sphi 0, %s118
      %s119 = sphi 0, %s116
      %s120 = sphi 0, %s119
      %s136 = sphi 0, %s120
    $region4: #{tpu_custom_call.1} parent=1 // loop_header_branch
      %20 = sbr.rel (%p18) target = $region8
    $region5: #{tpu_custom_call.1} parent=1 // loop_body
      %s22 = ssub.s32 %s17, 1
      %s23 = ssub.s32 %s17, 2
      %s24 = sadd.s32 %s17, 1
      %s25 = ssub.s32 %s17, %s24
      %p26 = scmp.eq.s32.totalorder %s25, 0
      %s28 = sadd.s32 %s27, 1
      %s29 = scalar_select %p26, %s27, %s28
      %p32 = pneg %p26
      %p33 = scmp.eq.s32.totalorder %s17, 1
      %p34 = por %p32, %p33
      %p35 = scmp.ne.s32.totalorder %s27, %s30
      %p36 = scmp.eq.s32.totalorder %s17, 0
      %p37 = por %p35, %p36
      %p38 = scmp.ne.s32.totalorder %s27, %s30
      %p39 = scmp.eq.s32.totalorder %s22, 1
      %p40 = por %p38, %p39
      %p41 = scmp.ne.s32.totalorder %s30, %s31
      %p42 = scmp.eq.s32.totalorder %s22, 0
      %p43 = por %p41, %p42
      %p44 = scmp.ne.s32.totalorder %s30, %s31
      %p45 = scmp.eq.s32.totalorder %s23, 1
      %p46 = por %p44, %p45
      %p48 = scmp.ne.s32.totalorder %s31, %s47
      %p49 = scmp.eq.s32.totalorder %s23, 0
      %p50 = por %p48, %p49
      %s52 = sadd.s32 %s51, 1
      %p55 = scmp.eq.s32.totalorder %s17, 1
      %p56 = scmp.ne.s32.totalorder %s51, %s53
      %p57 = scmp.eq.s32.totalorder %s17, 0
      %p58 = por %p56, %p57
      %p59 = scmp.ne.s32.totalorder %s51, %s53
      %p60 = scmp.eq.s32.totalorder %s22, 1
      %p61 = por %p59, %p60
      %p62 = scmp.ne.s32.totalorder %s53, %s54
      %p63 = scmp.eq.s32.totalorder %s22, 0
      %p64 = por %p62, %p63
      %p65 = scmp.ne.s32.totalorder %s53, %s54
      %p66 = scmp.eq.s32.totalorder %s23, 1
      %p67 = por %p65, %p66
      %p69 = scmp.ne.s32.totalorder %s54, %s68
      %p70 = scmp.eq.s32.totalorder %s23, 0
      %p71 = por %p69, %p70
      %s73 = sadd.s32 %s72, 1
      %p76 = scmp.eq.s32.totalorder %s17, 1
      %p77 = scmp.ne.s32.totalorder %s72, %s74
      %p78 = scmp.eq.s32.totalorder %s17, 0
      %p79 = por %p77, %p78
      %p80 = scmp.ne.s32.totalorder %s72, %s74
      %p81 = scmp.eq.s32.totalorder %s22, 1
      %p82 = por %p80, %p81
      %p83 = scmp.ne.s32.totalorder %s74, %s75
      %p84 = scmp.eq.s32.totalorder %s22, 0
      %p85 = por %p83, %p84
      %p86 = scmp.ne.s32.totalorder %s74, %s75
      %p87 = scmp.eq.s32.totalorder %s23, 1
      %p88 = por %p86, %p87
      %p90 = scmp.ne.s32.totalorder %s75, %s89
      %p91 = scmp.eq.s32.totalorder %s23, 0
      %p92 = por %p90, %p91
      %s94 = sadd.s32 %s93, 1
      %p97 = scmp.eq.s32.totalorder %s17, 1
      %p98 = scmp.ne.s32.totalorder %s93, %s95
      %p99 = scmp.eq.s32.totalorder %s17, 0
      %p100 = por %p98, %p99
      %p101 = scmp.ne.s32.totalorder %s93, %s95
      %p102 = scmp.eq.s32.totalorder %s22, 1
      %p103 = por %p101, %p102
      %p104 = scmp.ne.s32.totalorder %s95, %s96
      %p105 = scmp.eq.s32.totalorder %s22, 0
      %p106 = por %p104, %p105
      %p107 = scmp.ne.s32.totalorder %s95, %s96
      %p108 = scmp.eq.s32.totalorder %s23, 1
      %p109 = por %p107, %p108
      %p111 = scmp.ne.s32.totalorder %s96, %s110
      %p112 = scmp.eq.s32.totalorder %s23, 0
      %p113 = por %p111, %p112
      %s114 = ssub.s32 %s17, %s24
      %p115 = scmp.eq.s32.totalorder %s114, 0
      %s117 = sadd.s32 %s116, 1
      %s118 = scalar_select %p115, %s116, %s117
      %p121 = pneg %p115
      %p122 = scmp.eq.s32.totalorder %s17, 1
      %p123 = por %p121, %p122
      %p124 = scmp.ne.s32.totalorder %s116, %s119
      %p125 = scmp.eq.s32.totalorder %s17, 0
      %p126 = por %p124, %p125
      %p127 = scmp.ne.s32.totalorder %s116, %s119
      %p128 = scmp.eq.s32.totalorder %s22, 1
      %p129 = por %p127, %p128
      %p130 = scmp.ne.s32.totalorder %s119, %s120
      %p131 = scmp.eq.s32.totalorder %s22, 0
      %p132 = por %p130, %p131
      %p133 = scmp.ne.s32.totalorder %s119, %s120
      %p134 = scmp.eq.s32.totalorder %s23, 1
      %p135 = por %p133, %p134
      %p137 = scmp.ne.s32.totalorder %s120, %s136
      %p138 = scmp.eq.s32.totalorder %s23, 0
      %p139 = por %p137, %p138
      %p140 = scmp.le.s32.totalorder 1, %s17
      %p141 = scmp.lt.s32.totalorder %s17, 3
      %p142 = pnand %p140, %p141
      %p143 = pneg %p142
      // Predicated region
      $region9: #{tpu_custom_call.1} parent=5 // pred_check
        _
      $region10: #{tpu_custom_call.1} parent=5 // pred_check_branch
        %145 = sbr.rel (%p142) target = $region12
      $region11: #{tpu_custom_call.1} parent=5 // pred_region
        %s146 = ssub.s32 %s17, 1
        // Predicated region
        $region13: #{tpu_custom_call.1} parent=11 // pred_check
          %p147 = pneg %p64
        $region14: #{tpu_custom_call.1} parent=11 // pred_check_branch
          %149 = sbr.rel (%p147) target = $region16
        $region15: #{tpu_custom_call.1} parent=11 // pred_region
          %s151 = ssub.s32 512, 512
          %152 = vsyncadd [#allocation6], %s151
          %s153 = sshll.u32 [#allocation5], 4
          %s154 = int_to_ptr.vmem [resolvable:$true] %s153
          %159 = dma.hbm_to_vmem [thread:$0]  %s1, 512, %s154, [#allocation6], 128, 128, 8
        $region16: #{tpu_custom_call.1} parent=11 // pred_fallthru
          _
        // Predicated region
        $region17: #{tpu_custom_call.1} parent=11 // pred_check
          %p160 = pneg %p85
        $region18: #{tpu_custom_call.1} parent=11 // pred_check_branch
          %162 = sbr.rel (%p160) target = $region20
        $region19: #{tpu_custom_call.1} parent=11 // pred_region
          %s164 = ssub.s32 512, 512
          %165 = vsyncadd [#allocation6], %s164
          %s166 = sshll.u32 [#allocation7], 4
          %s167 = int_to_ptr.vmem [resolvable:$true] %s166
          %172 = dma.hbm_to_vmem [thread:$0]  %s2, 512, %s167, [#allocation6], 128, 128, 8
        $region20: #{tpu_custom_call.1} parent=11 // pred_fallthru
          _
        // Predicated region
        $region21: #{tpu_custom_call.1} parent=11 // pred_check
          %p173 = pneg %p106
        $region22: #{tpu_custom_call.1} parent=11 // pred_check_branch
          %175 = sbr.rel (%p173) target = $region24
        $region23: #{tpu_custom_call.1} parent=11 // pred_region
          _
        $region24: #{tpu_custom_call.1} parent=11 // pred_fallthru
          _
      $region12: #{tpu_custom_call.1} parent=5 // pred_fallthru
        _
      %p176 = scmp.lt.s32.totalorder %s17, 2
      // Predicated region
      $region25: #{tpu_custom_call.1} parent=5 // pred_check
        %p177 = pneg %p176
      $region26: #{tpu_custom_call.1} parent=5 // pred_check_branch
        %179 = sbr.rel (%p177) target = $region28
      $region27: #{tpu_custom_call.1} parent=5 // pred_region
        // Predicated region
        $region29: #{tpu_custom_call.1} parent=27 // pred_check
          %p180 = pneg %p37
        $region30: #{tpu_custom_call.1} parent=27 // pred_check_branch
          %182 = sbr.rel (%p180) target = $region32
        $region31: #{tpu_custom_call.1} parent=27 // pred_region
          %s183 = sand.u32 %s27, 1
          %s184 = scalar_lea.sflag [#allocation3], %s183
          %s185 = sand.u32 %s27, 1
          %s186 = smul.addr %s185, 8
          %s187 = scalar_lea.vmem [#allocation2], %s186
          %s189 = ssub.s32 128, 128
          %190 = vsyncadd %s184, %s189
          %s191 = smul.addr %s17, 128
          %s192 = scalar_lea.hbm %s0, %s191
          %s194 = sshll.u32 %s187, 4
          %s195 = int_to_ptr.vmem [resolvable:$true] %s194
          %197 = dma.hbm_to_vmem [thread:$0]  %s192, 128, %s195, %s184
        $region32: #{tpu_custom_call.1} parent=27 // pred_fallthru
          _
      $region28: #{tpu_custom_call.1} parent=5 // pred_fallthru
        _
      %p198 = scmp.le.s32.totalorder 1, %s17
      %p199 = scmp.lt.s32.totalorder %s17, 3
      %p200 = pnand %p198, %p199
      %p201 = pneg %p200
      // Predicated region
      $region33: #{tpu_custom_call.1} parent=5 // pred_check
        _
      $region34: #{tpu_custom_call.1} parent=5 // pred_check_branch
        %203 = sbr.rel (%p200) target = $region36
      $region35: #{tpu_custom_call.1} parent=5 // pred_region
        %s204 = ssub.s32 %s17, 1
        %s205 = sand.u32 %s30, 1
        %s206 = scalar_lea.sflag [#allocation3], %s205
        %s207 = sand.u32 %s30, 1
        %s208 = smul.addr %s207, 8
        %s209 = scalar_lea.vmem [#allocation2], %s208
        // Predicated region
        $region37: #{tpu_custom_call.1} parent=35 // pred_check
          %p210 = pneg %p43
        $region38: #{tpu_custom_call.1} parent=35 // pred_check_branch
          %212 = sbr.rel (%p210) target = $region40
        $region39: #{tpu_custom_call.1} parent=35 // pred_region
          %213 = dma.done %s206, 128
        $region40: #{tpu_custom_call.1} parent=35 // pred_fallthru
          _
        // Predicated region
        $region41: #{tpu_custom_call.1} parent=35 // pred_check
          %p214 = pneg %p64
        $region42: #{tpu_custom_call.1} parent=35 // pred_check_branch
          %216 = sbr.rel (%p214) target = $region44
        $region43: #{tpu_custom_call.1} parent=35 // pred_region
          %217 = dma.done [#allocation6], 512
        $region44: #{tpu_custom_call.1} parent=35 // pred_fallthru
          _
        // Predicated region
        $region45: #{tpu_custom_call.1} parent=35 // pred_check
          %p218 = pneg %p85
        $region46: #{tpu_custom_call.1} parent=35 // pred_check_branch
          %220 = sbr.rel (%p218) target = $region48
        $region47: #{tpu_custom_call.1} parent=35 // pred_region
          %221 = dma.done [#allocation6], 512
        $region48: #{tpu_custom_call.1} parent=35 // pred_fallthru
          _
        %s222 = sand.u32 %s30, 1
        %s223 = scalar_lea.sflag [#allocation3], %s222
        %s224 = sand.u32 %s30, 1
        %s225 = smul.addr %s224, 8
        %s226 = scalar_lea.vmem [#allocation2], %s225
        %p227 = pneg %p43
        %p228 = pneg %p40
        %p229 = pneg %p64
        %p230 = pneg %p61
        %p231 = pneg %p85
        %p232 = pneg %p82
        %p233 = pneg %p106
        %p234 = pneg %p103
        %p235 = pneg %p132
        %p236 = pneg %p129
        %s237 = sand.u32 %s119, 1
        %s238 = scalar_lea.sflag [#allocation4], %s237
        %s239 = sand.u32 %s119, 1
        %s240 = smul.addr %s239, 8
        %s241 = scalar_lea.vmem [#allocation8], %s240
        %v242 = vld [vmem:[%s209] sm:$0xff]
        %v243 = vld [vmem:[#allocation5] sm:$0xff]
        %v244 = vld [vmem:[#allocation5 + $0x8] sm:$0xff]
        %v245 = vld [vmem:[#allocation5 + $0x10] sm:$0xff]
        %v246 = vld [vmem:[#allocation5 + $0x18] sm:$0xff]
        %vm247 = vcmask 261120
        %v249 = vsel %vm247, %v242, 0
        %251 = vmatprep.subr.mxu0 0.0
        %252 = vmatpush1.msra.mxu0 %v243
        %253 = vmatprep.subr.mxu0 0.0
        %254 = vmatpush1.msra.mxu0 %v244
        %255 = vmatprep.subr.mxu0 0.0
        %256 = vmatpush1.msra.mxu0 %v245
        %257 = vmatprep.subr.mxu0 0.0
        %258 = vmatpush1.msra.mxu0 %v246
        %259 = vmatprep.subr.mxu0 0.0
        %260 = vmatpush1.msra.mxu0 0.0
        %261 = vmatprep.subr.mxu0 0.0
        %262 = vmatpush1.msra.mxu0 0.0
        %263 = vmatprep.subr.mxu0 0.0
        %264 = vmatpush1.msra.mxu0 0.0
        %265 = vmatprep.subr.mxu0 0.0
        %266 = vmatpush1.msra.mxu0 0.0
        %267 = vmatprep.subr.mxu0 0.0
        %268 = vmatpush1.msra.mxu0 0.0
        %269 = vmatprep.subr.mxu0 0.0
        %270 = vmatpush1.msra.mxu0 0.0
        %271 = vmatprep.subr.mxu0 0.0
        %272 = vmatpush1.msra.mxu0 0.0
        %273 = vmatprep.subr.mxu0 0.0
        %274 = vmatpush1.msra.mxu0 0.0
        %275 = vmatprep.subr.mxu0 0.0
        %276 = vmatpush1.msra.mxu0 0.0
        %277 = vmatprep.subr.mxu0 0.0
        %278 = vmatpush1.msra.mxu0 0.0
        %279 = vmatprep.subr.mxu0 0.0
        %280 = vmatpush1.msra.mxu0 0.0
        %281 = vmatprep.subr.mxu0 0.0
        %282 = vmatpush1.msra.mxu0 0.0
        %283 = vmatprep.subr.mxu0 0.0
        %284 = vmatpush1.msra.mxu0 0.0
        %285 = vmatprep.subr.mxu0 0.0
        %286 = vmatpush1.msra.mxu0 0.0
        %287 = vmatprep.subr.mxu0 0.0
        %288 = vmatpush1.msra.mxu0 0.0
        %289 = vmatprep.subr.mxu0 0.0
        %290 = vmatpush1.msra.mxu0 0.0
        %291 = vmatprep.subr.mxu0 0.0
        %292 = vmatpush1.msra.mxu0 0.0
        %293 = vmatprep.subr.mxu0 0.0
        %294 = vmatpush1.msra.mxu0 0.0
        %295 = vmatprep.subr.mxu0 0.0
        %296 = vmatpush1.msra.mxu0 0.0
        %297 = vmatprep.subr.mxu0 0.0
        %298 = vmatpush1.msra.mxu0 0.0
        %299 = vmatprep.subr.mxu0 0.0
        %300 = vmatpush1.msra.mxu0 0.0
        %301 = vmatprep.subr.mxu0 0.0
        %302 = vmatpush1.msra.mxu0 0.0
        %303 = vmatprep.subr.mxu0 0.0
        %304 = vmatpush1.msra.mxu0 0.0
        %305 = vmatprep.subr.mxu0 0.0
        %306 = vmatpush1.msra.mxu0 0.0
        %307 = vmatprep.subr.mxu0 0.0
        %308 = vmatpush1.msra.mxu0 0.0
        %309 = vmatprep.subr.mxu0 0.0
        %310 = vmatpush1.msra.mxu0 0.0
        %311 = vmatprep.subr.mxu0 0.0
        %312 = vmatpush1.msra.mxu0 0.0
        %313 = vmatprep.subr.mxu0 0.0
        %314 = vmatpush1.msra.mxu0 0.0
        %315 = vmatprep.mubr.f32.mxu0 0.0
        %316 = vmatmul.mubr.f32.gmra.mrb[0].mxu0 %v249
        %v317 = vpop.f32.mrb[0].mxu0
        %v318 = vadd.f32 0.0, %v317
        %v319 = vpop.f32.mrb[0].mxu0
        %320 = vdwg.mxu0
        %322 = vrot.lane.b32.xlu0 %v318, 96
        %v323 = vpop.permute.xlu0 %322
        %vm324 = vcmask 130048
        %v325 = vsel %vm324, %v318, 0
        %v327 = vsel %vm324, %v323, 0
        %329 = vmatprep.subr.mxu0 0.0
        %330 = vmatpush1.xpose.msra.mxu0 %v327
        %331 = vmatprep.subr.mxu0 0.0
        %332 = vmatpush1.xpose.msra.mxu0 0.0
        %333 = vmatprep.subr.mxu0 0.0
        %334 = vmatpush1.xpose.msra.mxu0 0.0
        %335 = vmatprep.subr.mxu0 0.0
        %336 = vmatpush1.xpose.msra.mxu0 0.0
        %337 = vmatprep.subr.mxu0 0.0
        %338 = vmatpush1.xpose.msra.mxu0 0.0
        %339 = vmatprep.subr.mxu0 0.0
        %340 = vmatpush1.xpose.msra.mxu0 0.0
        %341 = vmatprep.subr.mxu0 0.0
        %342 = vmatpush1.xpose.msra.mxu0 0.0
        %343 = vmatprep.subr.mxu0 0.0
        %344 = vmatpush1.xpose.msra.mxu0 0.0
        %345 = vmatprep.subr.mxu0 0.0
        %346 = vmatpush1.xpose.msra.mxu0 0.0
        %347 = vmatprep.subr.mxu0 0.0
        %348 = vmatpush1.xpose.msra.mxu0 0.0
        %349 = vmatprep.subr.mxu0 0.0
        %350 = vmatpush1.xpose.msra.mxu0 0.0
        %351 = vmatprep.subr.mxu0 0.0
        %352 = vmatpush1.xpose.msra.mxu0 0.0
        %353 = vmatprep.subr.mxu0 0.0
        %354 = vmatpush1.xpose.msra.mxu0 0.0
        %355 = vmatprep.subr.mxu0 0.0
        %356 = vmatpush1.xpose.msra.mxu0 0.0
        %357 = vmatprep.subr.mxu0 0.0
        %358 = vmatpush1.xpose.msra.mxu0 0.0
        %359 = vmatprep.subr.mxu0 0.0
        %360 = vmatpush1.xpose.msra.mxu0 0.0
        %361 = vmatprep.subr.mxu0 0.0
        %362 = vmatpush1.xpose.msra.mxu0 0.0
        %363 = vmatprep.subr.mxu0 0.0
        %364 = vmatpush1.xpose.msra.mxu0 0.0
        %365 = vmatprep.subr.mxu0 0.0
        %366 = vmatpush1.xpose.msra.mxu0 0.0
        %367 = vmatprep.subr.mxu0 0.0
        %368 = vmatpush1.xpose.msra.mxu0 0.0
        %369 = vmatprep.subr.mxu0 0.0
        %370 = vmatpush1.xpose.msra.mxu0 0.0
        %371 = vmatprep.subr.mxu0 0.0
        %372 = vmatpush1.xpose.msra.mxu0 0.0
        %373 = vmatprep.subr.mxu0 0.0
        %374 = vmatpush1.xpose.msra.mxu0 0.0
        %375 = vmatprep.subr.mxu0 0.0
        %376 = vmatpush1.xpose.msra.mxu0 0.0
        %377 = vmatprep.subr.mxu0 0.0
        %378 = vmatpush1.xpose.msra.mxu0 0.0
        %379 = vmatprep.subr.mxu0 0.0
        %380 = vmatpush1.xpose.msra.mxu0 0.0
        %381 = vmatprep.subr.mxu0 0.0
        %382 = vmatpush1.xpose.msra.mxu0 0.0
        %383 = vmatprep.subr.mxu0 0.0
        %384 = vmatpush1.xpose.msra.mxu0 0.0
        %385 = vmatprep.subr.mxu0 0.0
        %386 = vmatpush1.xpose.msra.mxu0 0.0
        %387 = vmatprep.subr.mxu0 0.0
        %388 = vmatpush1.xpose.msra.mxu0 0.0
        %389 = vmatprep.subr.mxu0 0.0
        %390 = vmatpush1.xpose.msra.mxu0 0.0
        %391 = vmatprep.subr.mxu0 0.0
        %392 = vmatpush1.xpose.msra.mxu0 0.0
        %393 = vmatprep.mubr.f32.mxu0 0.0
        %394 = vmatmul.mubr.f32.gmra.mrb[0].mxu0 %v325
        %v395 = vpop.f32.mrb[0].mxu0
        %v396 = vadd.f32 0.0, %v395
        %v397 = vpop.f32.mrb[0].mxu0
        %398 = vdwg.mxu0
        %vm399 = vcmask 64512
        %v400 = vsel %vm399, %v396, -inf
        %401 = vmax.xlane.f32.xlu0 %v400
        %v402 = vpop.xlane.xlu0 %401
        %v403 = vsub.f32 %v396, %v402
        %v404 = vmul.f32 %v403, 1.442695
        %v405 = vpow.pop %v404
        %v406 = vsel %vm399, %v405, 0.0
        %407 = vadd.xlane.f32.xlu0 %v406
        %v408 = vpop.xlane.xlu0 %407
        %v409 = vrcp.pop %v408
        %v410 = vmul.f32 %v405, %v409
        %411 = vrot.lane.b32.xlu0 %v318, 64
        %v412 = vpop.permute.xlu0 %411
        %v415 = vsel %vm399, %v410, 0
        %417 = vmatprep.subr.mxu0 0.0
        %418 = vmatpush1.msra.mxu0 %v412
        %419 = vmatprep.subr.mxu0 0.0
        %420 = vmatpush1.msra.mxu0 0.0
        %421 = vmatprep.subr.mxu0 0.0
        %422 = vmatpush1.msra.mxu0 0.0
        %423 = vmatprep.subr.mxu0 0.0
        %424 = vmatpush1.msra.mxu0 0.0
        %425 = vmatprep.subr.mxu0 0.0
        %426 = vmatpush1.msra.mxu0 0.0
        %427 = vmatprep.subr.mxu0 0.0
        %428 = vmatpush1.msra.mxu0 0.0
        %429 = vmatprep.subr.mxu0 0.0
        %430 = vmatpush1.msra.mxu0 0.0
        %431 = vmatprep.subr.mxu0 0.0
        %432 = vmatpush1.msra.mxu0 0.0
        %433 = vmatprep.subr.mxu0 0.0
        %434 = vmatpush1.msra.mxu0 0.0
        %435 = vmatprep.subr.mxu0 0.0
        %436 = vmatpush1.msra.mxu0 0.0
        %437 = vmatprep.subr.mxu0 0.0
        %438 = vmatpush1.msra.mxu0 0.0
        %439 = vmatprep.subr.mxu0 0.0
        %440 = vmatpush1.msra.mxu0 0.0
        %441 = vmatprep.subr.mxu0 0.0
        %442 = vmatpush1.msra.mxu0 0.0
        %443 = vmatprep.subr.mxu0 0.0
        %444 = vmatpush1.msra.mxu0 0.0
        %445 = vmatprep.subr.mxu0 0.0
        %446 = vmatpush1.msra.mxu0 0.0
        %447 = vmatprep.subr.mxu0 0.0
        %448 = vmatpush1.msra.mxu0 0.0
        %449 = vmatprep.subr.mxu0 0.0
        %450 = vmatpush1.msra.mxu0 0.0
        %451 = vmatprep.subr.mxu0 0.0
        %452 = vmatpush1.msra.mxu0 0.0
        %453 = vmatprep.subr.mxu0 0.0
        %454 = vmatpush1.msra.mxu0 0.0
        %455 = vmatprep.subr.mxu0 0.0
        %456 = vmatpush1.msra.mxu0 0.0
        %457 = vmatprep.subr.mxu0 0.0
        %458 = vmatpush1.msra.mxu0 0.0
        %459 = vmatprep.subr.mxu0 0.0
        %460 = vmatpush1.msra.mxu0 0.0
        %461 = vmatprep.subr.mxu0 0.0
        %462 = vmatpush1.msra.mxu0 0.0
        %463 = vmatprep.subr.mxu0 0.0
        %464 = vmatpush1.msra.mxu0 0.0
        %465 = vmatprep.subr.mxu0 0.0
        %466 = vmatpush1.msra.mxu0 0.0
        %467 = vmatprep.subr.mxu0 0.0
        %468 = vmatpush1.msra.mxu0 0.0
        %469 = vmatprep.subr.mxu0 0.0
        %470 = vmatpush1.msra.mxu0 0.0
        %471 = vmatprep.subr.mxu0 0.0
        %472 = vmatpush1.msra.mxu0 0.0
        %473 = vmatprep.subr.mxu0 0.0
        %474 = vmatpush1.msra.mxu0 0.0
        %475 = vmatprep.subr.mxu0 0.0
        %476 = vmatpush1.msra.mxu0 0.0
        %477 = vmatprep.subr.mxu0 0.0
        %478 = vmatpush1.msra.mxu0 0.0
        %479 = vmatprep.subr.mxu0 0.0
        %480 = vmatpush1.msra.mxu0 0.0
        %481 = vmatprep.mubr.f32.mxu0 0.0
        %482 = vmatmul.mubr.f32.gmra.mrb[0].mxu0 %v415
        %v483 = vpop.f32.mrb[0].mxu0
        %v484 = vadd.f32 0.0, %v483
        %v485 = vpop.f32.mrb[0].mxu0
        %486 = vdwg.mxu0
        %487 = vrot.lane.b32.xlu0 %v318, 112
        %v488 = vpop.permute.xlu0 %487
        %489 = vrot.lane.b32.xlu0 %v318, 80
        %v490 = vpop.permute.xlu0 %489
        %v491 = vsel %vm324, %v488, 0
        %v493 = vsel %vm324, %v490, 0
        %495 = vmatprep.subr.mxu0 0.0
        %496 = vmatpush1.xpose.msra.mxu0 %v493
        %497 = vmatprep.subr.mxu0 0.0
        %498 = vmatpush1.xpose.msra.mxu0 0.0
        %499 = vmatprep.subr.mxu0 0.0
        %500 = vmatpush1.xpose.msra.mxu0 0.0
        %501 = vmatprep.subr.mxu0 0.0
        %502 = vmatpush1.xpose.msra.mxu0 0.0
        %503 = vmatprep.subr.mxu0 0.0
        %504 = vmatpush1.xpose.msra.mxu0 0.0
        %505 = vmatprep.subr.mxu0 0.0
        %506 = vmatpush1.xpose.msra.mxu0 0.0
        %507 = vmatprep.subr.mxu0 0.0
        %508 = vmatpush1.xpose.msra.mxu0 0.0
        %509 = vmatprep.subr.mxu0 0.0
        %510 = vmatpush1.xpose.msra.mxu0 0.0
        %511 = vmatprep.subr.mxu0 0.0
        %512 = vmatpush1.xpose.msra.mxu0 0.0
        %513 = vmatprep.subr.mxu0 0.0
        %514 = vmatpush1.xpose.msra.mxu0 0.0
        %515 = vmatprep.subr.mxu0 0.0
        %516 = vmatpush1.xpose.msra.mxu0 0.0
        %517 = vmatprep.subr.mxu0 0.0
        %518 = vmatpush1.xpose.msra.mxu0 0.0
        %519 = vmatprep.subr.mxu0 0.0
        %520 = vmatpush1.xpose.msra.mxu0 0.0
        %521 = vmatprep.subr.mxu0 0.0
        %522 = vmatpush1.xpose.msra.mxu0 0.0
        %523 = vmatprep.subr.mxu0 0.0
        %524 = vmatpush1.xpose.msra.mxu0 0.0
        %525 = vmatprep.subr.mxu0 0.0
        %526 = vmatpush1.xpose.msra.mxu0 0.0
        %527 = vmatprep.subr.mxu0 0.0
        %528 = vmatpush1.xpose.msra.mxu0 0.0
        %529 = vmatprep.subr.mxu0 0.0
        %530 = vmatpush1.xpose.msra.mxu0 0.0
        %531 = vmatprep.subr.mxu0 0.0
        %532 = vmatpush1.xpose.msra.mxu0 0.0
        %533 = vmatprep.subr.mxu0 0.0
        %534 = vmatpush1.xpose.msra.mxu0 0.0
        %535 = vmatprep.subr.mxu0 0.0
        %536 = vmatpush1.xpose.msra.mxu0 0.0
        %537 = vmatprep.subr.mxu0 0.0
        %538 = vmatpush1.xpose.msra.mxu0 0.0
        %539 = vmatprep.subr.mxu0 0.0
        %540 = vmatpush1.xpose.msra.mxu0 0.0
        %541 = vmatprep.subr.mxu0 0.0
        %542 = vmatpush1.xpose.msra.mxu0 0.0
        %543 = vmatprep.subr.mxu0 0.0
        %544 = vmatpush1.xpose.msra.mxu0 0.0
        %545 = vmatprep.subr.mxu0 0.0
        %546 = vmatpush1.xpose.msra.mxu0 0.0
        %547 = vmatprep.subr.mxu0 0.0
        %548 = vmatpush1.xpose.msra.mxu0 0.0
        %549 = vmatprep.subr.mxu0 0.0
        %550 = vmatpush1.xpose.msra.mxu0 0.0
        %551 = vmatprep.subr.mxu0 0.0
        %552 = vmatpush1.xpose.msra.mxu0 0.0
        %553 = vmatprep.subr.mxu0 0.0
        %554 = vmatpush1.xpose.msra.mxu0 0.0
        %555 = vmatprep.subr.mxu0 0.0
        %556 = vmatpush1.xpose.msra.mxu0 0.0
        %557 = vmatprep.subr.mxu0 0.0
        %558 = vmatpush1.xpose.msra.mxu0 0.0
        %559 = vmatprep.mubr.f32.mxu0 0.0
        %560 = vmatmul.mubr.f32.gmra.mrb[0].mxu0 %v491
        %v561 = vpop.f32.mrb[0].mxu0
        %v562 = vadd.f32 0.0, %v561
        %v563 = vpop.f32.mrb[0].mxu0
        %564 = vdwg.mxu0
        %v565 = vsel %vm399, %v562, -inf
        %566 = vmax.xlane.f32.xlu0 %v565
        %v567 = vpop.xlane.xlu0 %566
        %v568 = vsub.f32 %v562, %v567
        %v569 = vmul.f32 %v568, 1.442695
        %v570 = vpow.pop %v569
        %v571 = vsel %vm399, %v570, 0.0
        %572 = vadd.xlane.f32.xlu0 %v571
        %v573 = vpop.xlane.xlu0 %572
        %v574 = vrcp.pop %v573
        %v575 = vmul.f32 %v570, %v574
        %576 = vrot.lane.b32.xlu0 %v318, 48
        %v577 = vpop.permute.xlu0 %576
        %v580 = vsel %vm399, %v575, 0
        %582 = vmatprep.subr.mxu0 0.0
        %583 = vmatpush1.msra.mxu0 %v577
        %584 = vmatprep.subr.mxu0 0.0
        %585 = vmatpush1.msra.mxu0 0.0
        %586 = vmatprep.subr.mxu0 0.0
        %587 = vmatpush1.msra.mxu0 0.0
        %588 = vmatprep.subr.mxu0 0.0
        %589 = vmatpush1.msra.mxu0 0.0
        %590 = vmatprep.subr.mxu0 0.0
        %591 = vmatpush1.msra.mxu0 0.0
        %592 = vmatprep.subr.mxu0 0.0
        %593 = vmatpush1.msra.mxu0 0.0
        %594 = vmatprep.subr.mxu0 0.0
        %595 = vmatpush1.msra.mxu0 0.0
        %596 = vmatprep.subr.mxu0 0.0
        %597 = vmatpush1.msra.mxu0 0.0
        %598 = vmatprep.subr.mxu0 0.0
        %599 = vmatpush1.msra.mxu0 0.0
        %600 = vmatprep.subr.mxu0 0.0
        %601 = vmatpush1.msra.mxu0 0.0
        %602 = vmatprep.subr.mxu0 0.0
        %603 = vmatpush1.msra.mxu0 0.0
        %604 = vmatprep.subr.mxu0 0.0
        %605 = vmatpush1.msra.mxu0 0.0
        %606 = vmatprep.subr.mxu0 0.0
        %607 = vmatpush1.msra.mxu0 0.0
        %608 = vmatprep.subr.mxu0 0.0
        %609 = vmatpush1.msra.mxu0 0.0
        %610 = vmatprep.subr.mxu0 0.0
        %611 = vmatpush1.msra.mxu0 0.0
        %612 = vmatprep.subr.mxu0 0.0
        %613 = vmatpush1.msra.mxu0 0.0
        %614 = vmatprep.subr.mxu0 0.0
        %615 = vmatpush1.msra.mxu0 0.0
        %616 = vmatprep.subr.mxu0 0.0
        %617 = vmatpush1.msra.mxu0 0.0
        %618 = vmatprep.subr.mxu0 0.0
        %619 = vmatpush1.msra.mxu0 0.0
        %620 = vmatprep.subr.mxu0 0.0
        %621 = vmatpush1.msra.mxu0 0.0
        %622 = vmatprep.subr.mxu0 0.0
        %623 = vmatpush1.msra.mxu0 0.0
        %624 = vmatprep.subr.mxu0 0.0
        %625 = vmatpush1.msra.mxu0 0.0
        %626 = vmatprep.subr.mxu0 0.0
        %627 = vmatpush1.msra.mxu0 0.0
        %628 = vmatprep.subr.mxu0 0.0
        %629 = vmatpush1.msra.mxu0 0.0
        %630 = vmatprep.subr.mxu0 0.0
        %631 = vmatpush1.msra.mxu0 0.0
        %632 = vmatprep.subr.mxu0 0.0
        %633 = vmatpush1.msra.mxu0 0.0
        %634 = vmatprep.subr.mxu0 0.0
        %635 = vmatpush1.msra.mxu0 0.0
        %636 = vmatprep.subr.mxu0 0.0
        %637 = vmatpush1.msra.mxu0 0.0
        %638 = vmatprep.subr.mxu0 0.0
        %639 = vmatpush1.msra.mxu0 0.0
        %640 = vmatprep.subr.mxu0 0.0
        %641 = vmatpush1.msra.mxu0 0.0
        %642 = vmatprep.subr.mxu0 0.0
        %643 = vmatpush1.msra.mxu0 0.0
        %644 = vmatprep.subr.mxu0 0.0
        %645 = vmatpush1.msra.mxu0 0.0
        %646 = vmatprep.mubr.f32.mxu0 0.0
        %647 = vmatmul.mubr.f32.gmra.mrb[0].mxu0 %v580
        %v648 = vpop.f32.mrb[0].mxu0
        %v649 = vadd.f32 0.0, %v648
        %v650 = vpop.f32.mrb[0].mxu0
        %651 = vdwg.mxu0
        %653 = vrot.lane.b32.xlu0 %v649, 16
        %v654 = vpop.permute.xlu0 %653
        %v656 = vsel %vm324, %v484, %v654
        %v657 = vld [vmem:[#allocation7] sm:$0xff]
        %v658 = vld [vmem:[#allocation7 + $0x8] sm:$0xff]
        %v659 = vld [vmem:[#allocation7 + $0x10] sm:$0xff]
        %v660 = vld [vmem:[#allocation7 + $0x18] sm:$0xff]
        %v661 = vld [vmem:[%s3] sm:$0x1]
        %v663 = vlaneseq
        %v664 = vshrl.u32 %v663, 7
        %v665 = vsub.s32 0, %v664
        %v666 = vrot.slane %v661, %v665
        %v669 = vsel %vm247, %v656, 0
        %671 = vmatprep.subr.mxu0 0.0
        %672 = vmatpush1.msra.mxu0 %v657
        %673 = vmatprep.subr.mxu0 0.0
        %674 = vmatpush1.msra.mxu0 %v658
        %675 = vmatprep.subr.mxu0 0.0
        %676 = vmatpush1.msra.mxu0 %v659
        %677 = vmatprep.subr.mxu0 0.0
        %678 = vmatpush1.msra.mxu0 %v660
        %679 = vmatprep.subr.mxu0 0.0
        %680 = vmatpush1.msra.mxu0 0.0
        %681 = vmatprep.subr.mxu0 0.0
        %682 = vmatpush1.msra.mxu0 0.0
        %683 = vmatprep.subr.mxu0 0.0
        %684 = vmatpush1.msra.mxu0 0.0
        %685 = vmatprep.subr.mxu0 0.0
        %686 = vmatpush1.msra.mxu0 0.0
        %687 = vmatprep.subr.mxu0 0.0
        %688 = vmatpush1.msra.mxu0 0.0
        %689 = vmatprep.subr.mxu0 0.0
        %690 = vmatpush1.msra.mxu0 0.0
        %691 = vmatprep.subr.mxu0 0.0
        %692 = vmatpush1.msra.mxu0 0.0
        %693 = vmatprep.subr.mxu0 0.0
        %694 = vmatpush1.msra.mxu0 0.0
        %695 = vmatprep.subr.mxu0 0.0
        %696 = vmatpush1.msra.mxu0 0.0
        %697 = vmatprep.subr.mxu0 0.0
        %698 = vmatpush1.msra.mxu0 0.0
        %699 = vmatprep.subr.mxu0 0.0
        %700 = vmatpush1.msra.mxu0 0.0
        %701 = vmatprep.subr.mxu0 0.0
        %702 = vmatpush1.msra.mxu0 0.0
        %703 = vmatprep.subr.mxu0 0.0
        %704 = vmatpush1.msra.mxu0 0.0
        %705 = vmatprep.subr.mxu0 0.0
        %706 = vmatpush1.msra.mxu0 0.0
        %707 = vmatprep.subr.mxu0 0.0
        %708 = vmatpush1.msra.mxu0 0.0
        %709 = vmatprep.subr.mxu0 0.0
        %710 = vmatpush1.msra.mxu0 0.0
        %711 = vmatprep.subr.mxu0 0.0
        %712 = vmatpush1.msra.mxu0 0.0
        %713 = vmatprep.subr.mxu0 0.0
        %714 = vmatpush1.msra.mxu0 0.0
        %715 = vmatprep.subr.mxu0 0.0
        %716 = vmatpush1.msra.mxu0 0.0
        %717 = vmatprep.subr.mxu0 0.0
        %718 = vmatpush1.msra.mxu0 0.0
        %719 = vmatprep.subr.mxu0 0.0
        %720 = vmatpush1.msra.mxu0 0.0
        %721 = vmatprep.subr.mxu0 0.0
        %722 = vmatpush1.msra.mxu0 0.0
        %723 = vmatprep.subr.mxu0 0.0
        %724 = vmatpush1.msra.mxu0 0.0
        %725 = vmatprep.subr.mxu0 0.0
        %726 = vmatpush1.msra.mxu0 0.0
        %727 = vmatprep.subr.mxu0 0.0
        %728 = vmatpush1.msra.mxu0 0.0
        %729 = vmatprep.subr.mxu0 0.0
        %730 = vmatpush1.msra.mxu0 0.0
        %731 = vmatprep.subr.mxu0 0.0
        %732 = vmatpush1.msra.mxu0 0.0
        %733 = vmatprep.subr.mxu0 0.0
        %734 = vmatpush1.msra.mxu0 0.0
        %735 = vmatprep.mubr.f32.mxu0 0.0
        %736 = vmatmul.mubr.f32.gmra.mrb[0].mxu0 %v669
        %v737 = vpop.f32.mrb[0].mxu0
        %v738 = vadd.f32 %v666, %v737
        %v739 = vpop.f32.mrb[0].mxu0
        %740 = vdwg.mxu0
        %741 = vst.msk [vmem:[%s241] sm:$0xff] %vm247, %v738
        %s742 = sand.u32 %s119, 1
        %s743 = scalar_lea.sflag [#allocation4], %s742
        %s744 = sand.u32 %s119, 1
        %s745 = smul.addr %s744, 8
        %s746 = scalar_lea.vmem [#allocation8], %s745
        // Predicated region
        $region49: #{tpu_custom_call.1} parent=35 // pred_check
          %p747 = pneg %p129
        $region50: #{tpu_custom_call.1} parent=35 // pred_check_branch
          %749 = sbr.rel (%p747) target = $region52
        $region51: #{tpu_custom_call.1} parent=35 // pred_region
          %s751 = ssub.s32 128, 128
          %752 = vsyncadd %s743, %s751
          %s753 = smul.addr %s22, 128
          %s754 = scalar_lea.hbm %s4, %s753
          %s756 = sshll.u32 %s746, 4
          %s757 = int_to_ptr.vmem [resolvable:$true] %s756
          %759 = dma.vmem_to_hbm [thread:$0]  %s757, 128, %s754, %s743
        $region52: #{tpu_custom_call.1} parent=35 // pred_fallthru
          _
      $region36: #{tpu_custom_call.1} parent=5 // pred_fallthru
        _
      %p760 = scmp.le.s32.totalorder 2, %s17
      // Predicated region
      $region53: #{tpu_custom_call.1} parent=5 // pred_check
        %p761 = pneg %p760
      $region54: #{tpu_custom_call.1} parent=5 // pred_check_branch
        %763 = sbr.rel (%p761) target = $region56
      $region55: #{tpu_custom_call.1} parent=5 // pred_region
        %s764 = ssub.s32 %s17, 2
        // Predicated region
        $region57: #{tpu_custom_call.1} parent=55 // pred_check
          %p765 = pneg %p135
        $region58: #{tpu_custom_call.1} parent=55 // pred_check_branch
          %767 = sbr.rel (%p765) target = $region60
        $region59: #{tpu_custom_call.1} parent=55 // pred_region
          %s768 = sand.u32 %s120, 1
          %s769 = scalar_lea.sflag [#allocation4], %s768
          %s770 = sand.u32 %s120, 1
          %s771 = smul.addr %s770, 8
          %s772 = scalar_lea.vmem [#allocation8], %s771
          %773 = dma.done %s769, 128
        $region60: #{tpu_custom_call.1} parent=55 // pred_fallthru
          _
      $region56: #{tpu_custom_call.1} parent=5 // pred_fallthru
        _
    $region6: #{tpu_custom_call.1} parent=1 // loop_footer
      %s21 = sadd.s32 1, %s17
    $region7: #{tpu_custom_call.1} parent=1 // loop_footer_branch
      %16 = sbr.rel target = $region3
    $region8: #{tpu_custom_call.1} parent=1 // loop_exit
      _
    %774 = vsyncpa [#allocation3], 1
    %s775 = scalar_lea.sflag [#allocation3], 1
    %776 = vsyncpa %s775, 1
    %777 = vsyncpa [#allocation6], 1
    %778 = vsyncpa [#allocation4], 1
    %s779 = scalar_lea.sflag [#allocation4], 1
    %780 = vsyncpa %s779, 1

</llo_original>
